<compile_context>
chip_gen: v6e
topology: v6e:2x2x1
jax: 0.10.0
libtpu: 0.0.40
codegen_flags: <defaults>
</compile_context>

<pallas_src>
import functools

import jax
import jax.numpy as jnp
from jax.experimental import pallas as pl
from jax.experimental.pallas import tpu as pltpu


def _iou_loss_kernel(x_ref, t_ref, out_ref, inter_ref, union_ref, *,
                     num_channels, smooth, hw, tile_s, chunk_s, needs_mask):
    """Grid = (batch_tiles, spatial_tiles).

    Block shapes:
      x_ref:   (TILE_B, C, TILE_S, 128)   logits
      t_ref:   (TILE_B, 1, TILE_S, 128)   targets
      out_ref: (TILE_B, 1, 1)             per-image 1 - IoU
    Scratch:
      inter_ref / union_ref: (TILE_B, 128) f32 lane-dense accumulators.
    """
    s = pl.program_id(1)
    ns = pl.num_programs(1)

    @pl.when(s == 0)
    def _init():
        inter_ref[...] = jnp.zeros_like(inter_ref)
        union_ref[...] = jnp.zeros_like(union_ref)

    def piece(r0, nr, masked):
        rows = pl.ds(r0, nr)

        # Pass 1: running channel max (dense (TILE_B, nr, 128) slabs).
        m = x_ref[:, 0, rows, :].astype(jnp.float32)
        for ch in range(1, num_channels):
            m = jnp.maximum(m, x_ref[:, ch, rows, :].astype(jnp.float32))

        # Pass 2: exp-sum denominator; keep only the channel-1 numerator.
        denom = jnp.zeros_like(m)
        num = None
        for ch in range(num_channels):
            e = jnp.exp(x_ref[:, ch, rows, :].astype(jnp.float32) - m)
            denom = denom + e
            if ch == 1:
                num = e

        # EUP approx reciprocal + one Newton-Raphson step (~f32 accuracy).
        r = pl.reciprocal(denom, approx=True)
        r = r * (2.0 - denom * r)
        p1 = num * r                                     # (TILE_B, nr, 128)

        tv = t_ref[:, 0, rows, :].astype(jnp.float32)

        if masked:
            # Padding lives only at the tail of the flattened spatial axis.
            # Must stay a select: padded lanes may hold inf/NaN garbage.
            row = jax.lax.broadcasted_iota(jnp.int32, p1.shape, 1)
            lane = jax.lax.broadcasted_iota(jnp.int32, p1.shape, 2)
            flat = (s * tile_s + r0 + row) * 128 + lane
            valid = flat < hw
            p1 = jnp.where(valid, p1, 0.0)
            tv = jnp.where(valid, tv, 0.0)

        prod = p1 * tv
        # Lane-dense partial sums; the cross-lane reduce happens only once,
        # on the last spatial tile (epilogue below).
        inter_ref[...] += jnp.sum(prod, axis=1)
        union_ref[...] += jnp.sum(p1 + tv - prod, axis=1)

    def sweep(masked):
        nfull = tile_s // chunk_s
        tail = tile_s - nfull * chunk_s
        if nfull == 1:
            piece(0, chunk_s, masked)
        elif nfull > 1:
            def body(ci, carry):
                piece(pl.multiple_of(ci * chunk_s, chunk_s), chunk_s, masked)
                return carry
            jax.lax.fori_loop(0, nfull, body, 0)
        if tail:
            piece(nfull * chunk_s, tail, masked)

    if not needs_mask:
        sweep(False)
    elif ns == 1:
        sweep(True)
    else:
        # Only the last spatial tile contains padding; keep the steady-state
        # path free of the iota/compare/select work.
        @pl.when(s < ns - 1)
        def _steady():
            sweep(False)

        @pl.when(s == ns - 1)
        def _last():
            sweep(True)

    @pl.when(s == ns - 1)
    def _finalize():
        inter = jnp.sum(inter_ref[...], axis=1, keepdims=True)   # (TILE_B, 1)
        union = jnp.sum(union_ref[...], axis=1, keepdims=True)
        iou = (inter + smooth) / (union + smooth)
        out_ref[...] = jnp.reshape(1.0 - iou, out_ref.shape)


def iou_loss(inputs, targets, smooth=1.0, *,
             target_block_bytes=6 << 20, chunk_rows=64):
    """Pallas-TPU IoU loss.

    inputs:  (N, C, H, W) logits (softmax over C, class-1 prob is used)
    targets: (N, H, W)    (any float/int dtype; cast to f32 in-kernel —
                           pass bf16/int8 to shrink the targets HBM stream)
    """
    n, c, h, w = inputs.shape
    if c < 2:
        raise ValueError(f"IoULoss uses the class-1 probability; need C >= 2, got C={c}")
    assert targets.shape == (n, h, w), (targets.shape, (n, h, w))

    hw = h * w
    s_rows = pl.cdiv(hw, 128)          # spatial rows of 128 lanes per image
    hw_pad = s_rows * 128

    x = inputs.reshape(n, c, hw)
    t = targets.reshape(n, 1, hw)
    if hw_pad != hw:
        # TODO(synk): a 3-D lane-dense fallback path would avoid this
        # whole-tensor pad when H*W is not a multiple of 128.
        x = jnp.pad(x, ((0, 0), (0, 0), (0, hw_pad - hw)))
        t = jnp.pad(t, ((0, 0), (0, 0), (0, hw_pad - hw)))
    x = x.reshape(n, c, s_rows, 128)
    t = t.reshape(n, 1, s_rows, 128)

    # ---- tiling: ~target_block_bytes of (x + t) per grid step ---------------
    bytes_per_row = (c * x.dtype.itemsize + t.dtype.itemsize) * 128
    rows_budget = max(8, int(target_block_bytes) // bytes_per_row)

    if s_rows <= rows_budget:
        # Pack whole images along the batch axis (small/medium images).
        tile_s = s_rows
        tile_b = max(1, min(n, rows_budget // s_rows, 2048))
    else:
        # Split the image along spatial rows (large images).
        tile_s = max(8, (rows_budget // 8) * 8)   # multiple of 8 (sublane rule)
        tile_b = 1

    num_b_tiles = pl.cdiv(n, tile_b)
    num_s_tiles = pl.cdiv(s_rows, tile_s)
    # Padding exists iff H*W isn't lane-aligned or the last spatial block is
    # partial; either way it is only in the last spatial tile.
    needs_mask = (hw_pad != hw) or (num_s_tiles * tile_s != s_rows)

    # In-kernel chunk rows (bounds live ranges / VMEM temporaries): aim for
    # ~chunk_rows combined (batch x spatial) rows, never more than 2048.
    chunk_s = min(tile_s, max(8, chunk_rows // tile_b), max(1, 2048 // tile_b))
    chunk_s = max(1, chunk_s)
    chunk_s = 1 << (chunk_s.bit_length() - 1)     # power of two -> aligned pl.ds

    kernel = functools.partial(
        _iou_loss_kernel,
        num_channels=c,
        smooth=float(smooth),
        hw=hw,
        tile_s=tile_s,
        chunk_s=chunk_s,
        needs_mask=needs_mask,
    )

    per_image = pl.pallas_call(
        kernel,
        out_shape=jax.ShapeDtypeStruct((n, 1, 1), jnp.float32),
        grid_spec=pltpu.PrefetchScalarGridSpec(
            num_scalar_prefetch=0,
            grid=(num_b_tiles, num_s_tiles),
            in_specs=[
                pl.BlockSpec((tile_b, c, tile_s, 128), lambda b, s: (b, 0, s, 0)),
                pl.BlockSpec((tile_b, 1, tile_s, 128), lambda b, s: (b, 0, s, 0)),
            ],
            out_specs=pl.BlockSpec((tile_b, 1, 1), lambda b, s: (b, 0, 0)),
            scratch_shapes=[
                pltpu.VMEM((tile_b, 128), jnp.float32),   # intersection acc
                pltpu.VMEM((tile_b, 128), jnp.float32),   # union acc
            ],
        ),
        compiler_params=pltpu.CompilerParams(
            dimension_semantics=("parallel", "arbitrary"),
            vmem_limit_bytes=32 * 1024 * 1024,
        ),
    )(x, t)

    # Batch mean in the wrapper (matches torch.mean(1 - IoU)); keeps the batch
    # axis "parallel" for megacore.
    return jnp.mean(per_image)


if __name__ == "__main__":
    key = jax.random.PRNGKey(0)
    k1, k2 = jax.random.split(key)

    N, C, H, W = 2, 4, 16, 16
    inputs = jax.random.normal(k1, (N, C, H, W), dtype=jnp.float32)
    targets = (jax.random.uniform(k2, (N, H, W)) > 0.5).astype(jnp.float32)

    loss = jax.block_until_ready(iou_loss(inputs, targets, smooth=1.0))

    # Pure-JAX reference (mirrors the PyTorch forward exactly).
    p = jax.nn.softmax(inputs, axis=1)[:, 1, :, :]
    inter = jnp.sum(p * targets, axis=(1, 2))
    union = jnp.sum(p + targets - p * targets, axis=(1, 2))
    ref = jnp.mean(1.0 - (inter + 1.0) / (union + 1.0))

    assert jnp.allclose(loss, ref, atol=1e-5, rtol=1e-5), (loss, ref)
    print("KERNEL_OK")
</pallas_src>

<mosaic_0001>
module attributes {stable_mosaic.version = 11 : i64} {
  func.func @_iou_loss_kernel(%arg0: i32, %arg1: i32, %arg2: memref<2x4x2x128xf32, #tpu.memory_space<vmem>>, %arg3: memref<2x1x2x128xf32, #tpu.memory_space<vmem>>, %arg4: memref<2x1x1xf32, #tpu.memory_space<vmem>>, %arg5: memref<2x128xf32, #tpu.memory_space<vmem>>, %arg6: memref<2x128xf32, #tpu.memory_space<vmem>>) attributes {dimension_semantics = [#tpu.dimension_semantics<parallel>, #tpu.dimension_semantics<arbitrary>], iteration_bounds = array<i64: 1, 1>, scalar_prefetch = 0 : i64, scratch_operands = 2 : i64, tpu.core_type = #tpu.core_type<tc>, window_params = [{transform_indices = @transform_0, window_bounds = array<i64: 2, 4, 2, 128>}, {transform_indices = @transform_1, window_bounds = array<i64: 2, 1, 2, 128>}, {transform_indices = @transform_2, window_bounds = array<i64: 2, 1, 1>}]} {
    %c0_i32 = arith.constant 0 : i32
    %0 = arith.cmpi eq, %arg1, %c0_i32 : i32
    %1 = arith.extui %0 : i1 to i32
    %c0_i32_0 = arith.constant 0 : i32
    %2 = arith.cmpi ne, %1, %c0_i32_0 : i32
    scf.if %2 {
      %cst_46 = arith.constant 0.000000e+00 : f32
      %57 = vector.broadcast %cst_46 : f32 to vector<2x128xf32>
      %c0_47 = arith.constant 0 : index
      %c0_48 = arith.constant 0 : index
      %58 = vector.load %arg5[%c0_47, %c0_48] : memref<2x128xf32, #tpu.memory_space<vmem>>, vector<2x128xf32>
      tpu.vector_store %arg5[%c0_47, %c0_48], %57 {strides = array<i32>} : memref<2x128xf32, #tpu.memory_space<vmem>>, vector<2x128xf32>,
      %cst_49 = arith.constant 0.000000e+00 : f32
      %59 = vector.broadcast %cst_49 : f32 to vector<2x128xf32>
      %c0_50 = arith.constant 0 : index
      %c0_51 = arith.constant 0 : index
      %60 = vector.load %arg6[%c0_50, %c0_51] : memref<2x128xf32, #tpu.memory_space<vmem>>, vector<2x128xf32>
      tpu.vector_store %arg6[%c0_50, %c0_51], %59 {strides = array<i32>} : memref<2x128xf32, #tpu.memory_space<vmem>>, vector<2x128xf32>,
    } else {
    }
    %c0 = arith.constant 0 : index
    %c0_1 = arith.constant 0 : index
    %c0_2 = arith.constant 0 : index
    %c0_3 = arith.constant 0 : index
    %3 = vector.load %arg2[%c0, %c0_1, %c0_2, %c0_3] : memref<2x4x2x128xf32, #tpu.memory_space<vmem>>, vector<2x1x2x128xf32>
    %4 = vector.shape_cast %3 : vector<2x1x2x128xf32> to vector<2x2x128xf32>
    %c0_4 = arith.constant 0 : index
    %c1 = arith.constant 1 : index
    %c0_5 = arith.constant 0 : index
    %c0_6 = arith.constant 0 : index
    %5 = vector.load %arg2[%c0_4, %c1, %c0_5, %c0_6] : memref<2x4x2x128xf32, #tpu.memory_space<vmem>>, vector<2x1x2x128xf32>
    %6 = vector.shape_cast %5 : vector<2x1x2x128xf32> to vector<2x2x128xf32>
    %7 = arith.maximumf %4, %6 : vector<2x2x128xf32>
    %c0_7 = arith.constant 0 : index
    %c2 = arith.constant 2 : index
    %c0_8 = arith.constant 0 : index
    %c0_9 = arith.constant 0 : index
    %8 = vector.load %arg2[%c0_7, %c2, %c0_8, %c0_9] : memref<2x4x2x128xf32, #tpu.memory_space<vmem>>, vector<2x1x2x128xf32>
    %9 = vector.shape_cast %8 : vector<2x1x2x128xf32> to vector<2x2x128xf32>
    %10 = arith.maximumf %7, %9 : vector<2x2x128xf32>
    %c0_10 = arith.constant 0 : index
    %c3 = arith.constant 3 : index
    %c0_11 = arith.constant 0 : index
    %c0_12 = arith.constant 0 : index
    %11 = vector.load %arg2[%c0_10, %c3, %c0_11, %c0_12] : memref<2x4x2x128xf32, #tpu.memory_space<vmem>>, vector<2x1x2x128xf32>
    %12 = vector.shape_cast %11 : vector<2x1x2x128xf32> to vector<2x2x128xf32>
    %13 = arith.maximumf %10, %12 : vector<2x2x128xf32>
    %cst = arith.constant 0.000000e+00 : f32
    %14 = vector.broadcast %cst : f32 to vector<2x2x128xf32>
    %c0_13 = arith.constant 0 : index
    %c0_14 = arith.constant 0 : index
    %c0_15 = arith.constant 0 : index
    %c0_16 = arith.constant 0 : index
    %15 = vector.load %arg2[%c0_13, %c0_14, %c0_15, %c0_16] : memref<2x4x2x128xf32, #tpu.memory_space<vmem>>, vector<2x1x2x128xf32>
    %16 = vector.shape_cast %15 : vector<2x1x2x128xf32> to vector<2x2x128xf32>
    %17 = arith.subf %16, %13 : vector<2x2x128xf32>
    %18 = math.exp %17 : vector<2x2x128xf32>
    %19 = arith.addf %14, %18 : vector<2x2x128xf32>
    %c0_17 = arith.constant 0 : index
    %c1_18 = arith.constant 1 : index
    %c0_19 = arith.constant 0 : index
    %c0_20 = arith.constant 0 : index
    %20 = vector.load %arg2[%c0_17, %c1_18, %c0_19, %c0_20] : memref<2x4x2x128xf32, #tpu.memory_space<vmem>>, vector<2x1x2x128xf32>
    %21 = vector.shape_cast %20 : vector<2x1x2x128xf32> to vector<2x2x128xf32>
    %22 = arith.subf %21, %13 : vector<2x2x128xf32>
    %23 = math.exp %22 : vector<2x2x128xf32>
    %24 = arith.addf %19, %23 : vector<2x2x128xf32>
    %c0_21 = arith.constant 0 : index
    %c2_22 = arith.constant 2 : index
    %c0_23 = arith.constant 0 : index
    %c0_24 = arith.constant 0 : index
    %25 = vector.load %arg2[%c0_21, %c2_22, %c0_23, %c0_24] : memref<2x4x2x128xf32, #tpu.memory_space<vmem>>, vector<2x1x2x128xf32>
    %26 = vector.shape_cast %25 : vector<2x1x2x128xf32> to vector<2x2x128xf32>
    %27 = arith.subf %26, %13 : vector<2x2x128xf32>
    %28 = math.exp %27 : vector<2x2x128xf32>
    %29 = arith.addf %24, %28 : vector<2x2x128xf32>
    %c0_25 = arith.constant 0 : index
    %c3_26 = arith.constant 3 : index
    %c0_27 = arith.constant 0 : index
    %c0_28 = arith.constant 0 : index
    %30 = vector.load %arg2[%c0_25, %c3_26, %c0_27, %c0_28] : memref<2x4x2x128xf32, #tpu.memory_space<vmem>>, vector<2x1x2x128xf32>
    %31 = vector.shape_cast %30 : vector<2x1x2x128xf32> to vector<2x2x128xf32>
    %32 = arith.subf %31, %13 : vector<2x2x128xf32>
    %33 = math.exp %32 : vector<2x2x128xf32>
    %34 = arith.addf %29, %33 : vector<2x2x128xf32>
    %35 = tpu.reciprocal %34 {approx = true} : vector<2x2x128xf32> -> vector<2x2x128xf32>
    %36 = arith.mulf %34, %35 : vector<2x2x128xf32>
    %cst_29 = arith.constant 2.000000e+00 : f32
    %37 = vector.broadcast %cst_29 : f32 to vector<2x2x128xf32>
    %38 = arith.subf %37, %36 : vector<2x2x128xf32>
    %39 = arith.mulf %35, %38 : vector<2x2x128xf32>
    %40 = arith.mulf %23, %39 : vector<2x2x128xf32>
    %c0_30 = arith.constant 0 : index
    %c0_31 = arith.constant 0 : index
    %c0_32 = arith.constant 0 : index
    %c0_33 = arith.constant 0 : index
    %41 = vector.load %arg3[%c0_30, %c0_31, %c0_32, %c0_33] : memref<2x1x2x128xf32, #tpu.memory_space<vmem>>, vector<2x1x2x128xf32>
    %42 = vector.shape_cast %41 : vector<2x1x2x128xf32> to vector<2x2x128xf32>
    %43 = arith.mulf %40, %42 : vector<2x2x128xf32>
    %c0_34 = arith.constant 0 : index
    %c0_35 = arith.constant 0 : index
    %44 = vector.load %arg5[%c0_34, %c0_35] : memref<2x128xf32, #tpu.memory_space<vmem>>, vector<2x128xf32>
    %cst_36 = arith.constant dense<0.000000e+00> : vector<2x128xf32>
    %45 = vector.multi_reduction <add>, %43, %cst_36 [1] : vector<2x2x128xf32> to vector<2x128xf32>
    %46 = arith.addf %44, %45 : vector<2x128xf32>
    %c0_37 = arith.constant 0 : index
    %c0_38 = arith.constant 0 : index
    %47 = vector.load %arg5[%c0_37, %c0_38] : memref<2x128xf32, #tpu.memory_space<vmem>>, vector<2x128xf32>
    tpu.vector_store %arg5[%c0_37, %c0_38], %46 {strides = array<i32>} : memref<2x128xf32, #tpu.memory_space<vmem>>, vector<2x128xf32>,
    %c0_39 = arith.constant 0 : index
    %c0_40 = arith.constant 0 : index
    %48 = vector.load %arg6[%c0_39, %c0_40] : memref<2x128xf32, #tpu.memory_space<vmem>>, vector<2x128xf32>
    %49 = arith.addf %40, %42 : vector<2x2x128xf32>
    %50 = arith.subf %49, %43 : vector<2x2x128xf32>
    %cst_41 = arith.constant dense<0.000000e+00> : vector<2x128xf32>
    %51 = vector.multi_reduction <add>, %50, %cst_41 [1] : vector<2x2x128xf32> to vector<2x128xf32>
    %52 = arith.addf %48, %51 : vector<2x128xf32>
    %c0_42 = arith.constant 0 : index
    %c0_43 = arith.constant 0 : index
    %53 = vector.load %arg6[%c0_42, %c0_43] : memref<2x128xf32, #tpu.memory_space<vmem>>, vector<2x128xf32>
    tpu.vector_store %arg6[%c0_42, %c0_43], %52 {strides = array<i32>} : memref<2x128xf32, #tpu.memory_space<vmem>>, vector<2x128xf32>,
    %c0_i32_44 = arith.constant 0 : i32
    %54 = arith.cmpi eq, %arg1, %c0_i32_44 : i32
    %55 = arith.extui %54 : i1 to i32
    %c0_i32_45 = arith.constant 0 : i32
    %56 = arith.cmpi ne, %55, %c0_i32_45 : i32
    scf.if %56 {
      %c0_46 = arith.constant 0 : index
      %c0_47 = arith.constant 0 : index
      %57 = vector.load %arg5[%c0_46, %c0_47] : memref<2x128xf32, #tpu.memory_space<vmem>>, vector<2x128xf32>
      %cst_48 = arith.constant dense<0.000000e+00> : vector<2xf32>
      %58 = vector.multi_reduction <add>, %57, %cst_48 [1] : vector<2x128xf32> to vector<2xf32>
      %59 = vector.shape_cast %58 : vector<2xf32> to vector<2x1xf32>
      %c0_49 = arith.constant 0 : index
      %c0_50 = arith.constant 0 : index
      %60 = vector.load %arg6[%c0_49, %c0_50] : memref<2x128xf32, #tpu.memory_space<vmem>>, vector<2x128xf32>
      %cst_51 = arith.constant dense<0.000000e+00> : vector<2xf32>
      %61 = vector.multi_reduction <add>, %60, %cst_51 [1] : vector<2x128xf32> to vector<2xf32>
      %62 = vector.shape_cast %61 : vector<2xf32> to vector<2x1xf32>
      %cst_52 = arith.constant 1.000000e+00 : f32
      %63 = vector.broadcast %cst_52 : f32 to vector<2x1xf32>
      %64 = arith.addf %59, %63 : vector<2x1xf32>
      %cst_53 = arith.constant 1.000000e+00 : f32
      %65 = vector.broadcast %cst_53 : f32 to vector<2x1xf32>
      %66 = arith.addf %62, %65 : vector<2x1xf32>
      %67 = arith.divf %64, %66 : vector<2x1xf32>
      %cst_54 = arith.constant 1.000000e+00 : f32
      %68 = vector.broadcast %cst_54 : f32 to vector<2x1xf32>
      %69 = arith.subf %68, %67 : vector<2x1xf32>
      %70 = vector.shape_cast %69 : vector<2x1xf32> to vector<2x1x1xf32>
      %c0_55 = arith.constant 0 : index
      %c0_56 = arith.constant 0 : index
      %c0_57 = arith.constant 0 : index
      %71 = vector.load %arg4[%c0_55, %c0_56, %c0_57] : memref<2x1x1xf32, #tpu.memory_space<vmem>>, vector<2x1x1xf32>
      tpu.vector_store %arg4[%c0_55, %c0_56, %c0_57], %70 {strides = array<i32>} : memref<2x1x1xf32, #tpu.memory_space<vmem>>, vector<2x1x1xf32>,
    } else {
    }
    return
  }
  func.func @transform_0(%arg0: i32, %arg1: i32) -> (i32, i32, i32, i32) {
    %c0_i32 = arith.constant 0 : i32
    %c0_i32_0 = arith.constant 0 : i32
    %c0_i32_1 = arith.constant 0 : i32
    return %arg0, %c0_i32, %arg1, %c0_i32_0 : i32, i32, i32, i32
  }
  func.func @transform_1(%arg0: i32, %arg1: i32) -> (i32, i32, i32, i32) {
    %c0_i32 = arith.constant 0 : i32
    %c0_i32_0 = arith.constant 0 : i32
    %c0_i32_1 = arith.constant 0 : i32
    return %arg0, %c0_i32, %arg1, %c0_i32_0 : i32, i32, i32, i32
  }
  func.func @transform_2(%arg0: i32, %arg1: i32) -> (i32, i32, i32) {
    %c0_i32 = arith.constant 0 : i32
    %c0_i32_0 = arith.constant 0 : i32
    %c0_i32_1 = arith.constant 0 : i32
    return %arg0, %c0_i32, %c0_i32_0 : i32, i32, i32
  }
}

</mosaic_0001>

<llo_original>
// kernel: tpu_custom_call.1
$region0: #{tpu_custom_call.1}
  #allocation0 [shape = 'u32[]', space=smem, size = 0x4, offset = 0x4, fixed_abs, tag = 'smem constant byte address 0x4 - core index']
  #allocation1 [shape = 'u32[144,128]{1,0:T(1,128)}', space=vmem, size = 0x12000, scoped, tag = 'internal scratch']
  #allocation2 [shape = 'f32[2,128]{1,0:T(2,128)}', space=vmem, size = 0x400, scoped, tag = 'scratch operand']
  #allocation3 [shape = 'f32[2,128]{1,0:T(2,128)}', space=vmem, size = 0x400, scoped, tag = 'scratch operand']
  %s0 = inlined_call_operand.hbm [shape: f32[2,4,2,128], index: 0, kind: input, shape index: {}]
  %s1 = inlined_call_operand.hbm [shape: f32[2,1,2,128], index: 1, kind: input, shape index: {}]
  %s2 = inlined_call_operand.vmem [shape: f32[2,1,1], index: 2, kind: output, shape index: {}]
  %s3 = sld [smem:[#allocation0]]
  $region34: #{tpu_custom_call.1} parent=0
    _
  %s5 = ssub.s32 1, %s3
  %s6 = scalar_select 0, %s5, %s3
  $region1: #{tpu_custom_call.1} parent=0
    #allocation4 [shape = 'u8[8192]{0}', space=vmem, size = 0x2000, scoped, tag = 'input window, operand 0, single buffered']
    #allocation5 [shape = 's32[1]{0}', space=sflag, size = 0x4, scoped, tag = 'scoped memory for tpu_custom_call.1']
    #allocation6 [shape = 'u8[2048]{0}', space=vmem, size = 0x800, scoped, tag = 'input window, operand 1, single buffered']
    #allocation7 [shape = 's32[1]{0}', space=sflag, size = 0x4, scoped, tag = 'scoped memory for tpu_custom_call.1']
    %7 = vsyncpa [#allocation5], 0
    %8 = vsyncpa [#allocation7], 0
    // Predicated region
    $region2: #{tpu_custom_call.1} parent=1 // pred_check
      _
    $region3: #{tpu_custom_call.1} parent=1 // pred_check_branch
      %10 = sbr.rel (0) target = $region5
    $region4: #{tpu_custom_call.1} parent=1 // pred_region
      %s12 = ssub.s32 256, 256
      %13 = vsyncadd [#allocation5], %s12
      %s14 = sshll.u32 [#allocation4], 4
      %s15 = int_to_ptr.vmem [resolvable:$true] %s14
      %20 = dma.hbm_to_vmem [thread:$0]  %s0, 256, %s15, [#allocation5], 32, 32, 2
    $region5: #{tpu_custom_call.1} parent=1 // pred_fallthru
      _
    // Predicated region
    $region6: #{tpu_custom_call.1} parent=1 // pred_check
      _
    $region7: #{tpu_custom_call.1} parent=1 // pred_check_branch
      %22 = sbr.rel (0) target = $region9
    $region8: #{tpu_custom_call.1} parent=1 // pred_region
      %s24 = ssub.s32 64, 64
      %25 = vsyncadd [#allocation7], %s24
      %s26 = sshll.u32 [#allocation6], 4
      %s27 = int_to_ptr.vmem [resolvable:$true] %s26
      %32 = dma.hbm_to_vmem [thread:$0]  %s1, 64, %s27, [#allocation7], 32, 32, 2
    $region9: #{tpu_custom_call.1} parent=1 // pred_fallthru
      _
    // Predicated region
    $region10: #{tpu_custom_call.1} parent=1 // pred_check
      _
    $region11: #{tpu_custom_call.1} parent=1 // pred_check_branch
      %34 = sbr.rel (0) target = $region13
    $region12: #{tpu_custom_call.1} parent=1 // pred_region
      %35 = dma.done [#allocation5], 256
    $region13: #{tpu_custom_call.1} parent=1 // pred_fallthru
      _
    // Predicated region
    $region14: #{tpu_custom_call.1} parent=1 // pred_check
      _
    $region15: #{tpu_custom_call.1} parent=1 // pred_check_branch
      %37 = sbr.rel (0) target = $region17
    $region16: #{tpu_custom_call.1} parent=1 // pred_region
      %38 = dma.done [#allocation7], 64
    $region17: #{tpu_custom_call.1} parent=1 // pred_fallthru
      _
    %p39 = scmp.eq.s32.totalorder 0, 0
    // Predicated region
    $region18: #{tpu_custom_call.1} parent=1 // pred_check
      %p40 = pneg %p39
    $region19: #{tpu_custom_call.1} parent=1 // pred_check_branch
      %42 = sbr.rel (%p40) target = $region21
    $region20: #{tpu_custom_call.1} parent=1 // pred_region
      %43 = vst [vmem:[#allocation2] sm:$0x3] 0.0
      %44 = vst [vmem:[#allocation3] sm:$0x3] 0.0
    $region21: #{tpu_custom_call.1} parent=1 // pred_fallthru
      _
    %v45 = vld [vmem:[#allocation4] sm:$0x3]
    %v46 = vld [vmem:[#allocation4 + $0x8] sm:$0x3]
    %s47 = scalar_lea.vmem [#allocation4], 2
    %v48 = vld [vmem:[%s47] sm:$0x3]
    %v49 = vld [vmem:[%s47 + $0x8] sm:$0x3]
    %v50 = vmax.f32 %v45, %v48
    %v51 = vmax.f32 %v46, %v49
    %s52 = scalar_lea.vmem [#allocation4], 4
    %v53 = vld [vmem:[%s52] sm:$0x3]
    %v54 = vld [vmem:[%s52 + $0x8] sm:$0x3]
    %v55 = vmax.f32 %v50, %v53
    %v56 = vmax.f32 %v51, %v54
    %s57 = scalar_lea.vmem [#allocation4], 6
    %v58 = vld [vmem:[%s57] sm:$0x3]
    %v59 = vld [vmem:[%s57 + $0x8] sm:$0x3]
    %v60 = vmax.f32 %v55, %v58
    %v61 = vmax.f32 %v56, %v59
    %v62 = vsub.f32 %v45, %v60
    %v63 = vsub.f32 %v46, %v61
    %v64 = vmul.f32 %v62, 1.442695
    %v65 = vpow.pop %v64
    %v66 = vmul.f32 %v63, 1.442695
    %v67 = vpow.pop %v66
    %v68 = vadd.f32 %v65, 0.0
    %v69 = vadd.f32 %v67, 0.0
    %v70 = vsub.f32 %v48, %v60
    %v71 = vsub.f32 %v49, %v61
    %v72 = vmul.f32 %v70, 1.442695
    %v73 = vpow.pop %v72
    %v74 = vmul.f32 %v71, 1.442695
    %v75 = vpow.pop %v74
    %v76 = vadd.f32 %v68, %v73
    %v77 = vadd.f32 %v69, %v75
    %v78 = vsub.f32 %v53, %v60
    %v79 = vsub.f32 %v54, %v61
    %v80 = vmul.f32 %v78, 1.442695
    %v81 = vpow.pop %v80
    %v82 = vmul.f32 %v79, 1.442695
    %v83 = vpow.pop %v82
    %v84 = vadd.f32 %v76, %v81
    %v85 = vadd.f32 %v77, %v83
    %v86 = vsub.f32 %v58, %v60
    %v87 = vsub.f32 %v59, %v61
    %v88 = vmul.f32 %v86, 1.442695
    %v89 = vpow.pop %v88
    %v90 = vmul.f32 %v87, 1.442695
    %v91 = vpow.pop %v90
    %v92 = vadd.f32 %v84, %v89
    %v93 = vadd.f32 %v85, %v91
    %v94 = vrcp.pop %v92
    %v95 = vrcp.pop %v93
    %v96 = vmul.f32 %v92, %v94
    %v97 = vmul.f32 %v93, %v95
    %v98 = vsub.f32 2.0, %v96
    %v99 = vsub.f32 2.0, %v97
    %v100 = vmul.f32 %v94, %v98
    %v101 = vmul.f32 %v95, %v99
    %v102 = vmul.f32 %v73, %v100
    %v103 = vmul.f32 %v75, %v101
    %v104 = vld [vmem:[#allocation6] sm:$0x3]
    %v105 = vld [vmem:[#allocation6 + $0x2] sm:$0x3]
    %v106 = vmul.f32 %v102, %v104
    %v107 = vmul.f32 %v103, %v105
    %v108 = vld [vmem:[#allocation2] sm:$0x3]
    %vm109 = vcmask 1041408
    %v110 = vsel %vm109, %v106, 0.0
    %v111 = vrot.slane %v110, 4
    %v112 = vadd.f32 %v110, %v111
    %v113 = vrot.slane %v112, 2
    %v114 = vadd.f32 %v112, %v113
    %v115 = vrot.slane %v114, 1
    %v116 = vadd.f32 %v114, %v115
    %v117 = vsel %vm109, %v107, 0.0
    %v118 = vrot.slane %v117, 4
    %v119 = vadd.f32 %v117, %v118
    %v120 = vrot.slane %v119, 2
    %v121 = vadd.f32 %v119, %v120
    %v122 = vrot.slane %v121, 1
    %v123 = vadd.f32 %v121, %v122
    %vm126 = vcmask 1041409
    %v127 = vsel %vm126, %v123, %v116
    %v129 = vadd.f32 %v108, %v127
    %130 = vst [vmem:[#allocation2] sm:$0x3] %v129
    %v131 = vld [vmem:[#allocation3] sm:$0x3]
    %v132 = vadd.f32 %v102, %v104
    %v133 = vadd.f32 %v103, %v105
    %v134 = vsub.f32 %v132, %v106
    %v135 = vsub.f32 %v133, %v107
    %v136 = vsel %vm109, %v134, 0.0
    %v137 = vrot.slane %v136, 4
    %v138 = vadd.f32 %v136, %v137
    %v139 = vrot.slane %v138, 2
    %v140 = vadd.f32 %v138, %v139
    %v141 = vrot.slane %v140, 1
    %v142 = vadd.f32 %v140, %v141
    %v143 = vsel %vm109, %v135, 0.0
    %v144 = vrot.slane %v143, 4
    %v145 = vadd.f32 %v143, %v144
    %v146 = vrot.slane %v145, 2
    %v147 = vadd.f32 %v145, %v146
    %v148 = vrot.slane %v147, 1
    %v149 = vadd.f32 %v147, %v148
    %v152 = vsel %vm126, %v149, %v142
    %v154 = vadd.f32 %v131, %v152
    %155 = vst [vmem:[#allocation3] sm:$0x3] %v154
    // Predicated region
    $region22: #{tpu_custom_call.1} parent=1 // pred_check
      %p156 = pneg %p39
    $region23: #{tpu_custom_call.1} parent=1 // pred_check_branch
      %158 = sbr.rel (%p156) target = $region25
    $region24: #{tpu_custom_call.1} parent=1 // pred_region
      %v159 = vld [vmem:[#allocation2] sm:$0x3]
      %v160 = vsel %vm109, %v159, 0.0
      %161 = vadd.xlane.f32.xlu0 %v160
      %v162 = vpop.xlane.xlu0 %161
      %v163 = vld [vmem:[#allocation3] sm:$0x3]
      %v164 = vsel %vm109, %v163, 0.0
      %165 = vadd.xlane.f32.xlu0 %v164
      %v166 = vpop.xlane.xlu0 %165
      %v167 = vadd.f32 %v162, 1.0
      %v168 = vadd.f32 %v166, 1.0
      %v169 = vrcp.pop %v168
      %v170 = vmul.f32 %v167, %v169
      %v171 = vsub.f32 1.0, %v170
      %v173 = vlaneseq
      %v174 = vshrl.u32 %v173, 7
      %v175 = vsub.s32 0, %v174
      %v176 = vrot.slane %v171, %v175
      %v177 = vlaneseq
      %v178 = vshrl.u32 %v177, 7
      %v179 = vsub.s32 1, %v178
      %v180 = vrot.slane %v171, %v179
      %vm183 = vcmask 0
      %184 = vst.msk [vmem:[%s2] sm:$0x1] %vm183, %v176
      %185 = vst.msk [vmem:[%s2 + $0x1] sm:$0x1] %vm183, %v180
    $region25: #{tpu_custom_call.1} parent=1 // pred_fallthru
      _
    // Predicated region
    $region26: #{tpu_custom_call.1} parent=1 // pred_check
      _
    $region27: #{tpu_custom_call.1} parent=1 // pred_check_branch
      %187 = sbr.rel (0) target = $region29
    $region28: #{tpu_custom_call.1} parent=1 // pred_region
      _
    $region29: #{tpu_custom_call.1} parent=1 // pred_fallthru
      _
    // Predicated region
    $region30: #{tpu_custom_call.1} parent=1 // pred_check
      _
    $region31: #{tpu_custom_call.1} parent=1 // pred_check_branch
      %189 = sbr.rel (0) target = $region33
    $region32: #{tpu_custom_call.1} parent=1 // pred_region
      _
    $region33: #{tpu_custom_call.1} parent=1 // pred_fallthru
      _
    %190 = vsyncpa [#allocation5], 1
    %191 = vsyncpa [#allocation7], 1

</llo_original>
